<compile_context>
chip_gen: v6e
topology: v6e:2x2x1
jax: 0.10.0
libtpu: 0.0.40
codegen_flags: <defaults>
</compile_context>

<pallas_src>
import jax
import jax.numpy as jnp
from jax.experimental import pallas as pl
from jax.experimental.pallas import tpu as pltpu


def _round_up(x, m):
    return (x + m - 1) // m * m


# ---------------------------------------------------------------------------
# Pass 1: fused im2col-matmul conv + per-tile BN partial statistics.
# ---------------------------------------------------------------------------
def _conv_stats_kernel(p_ref, w_ref, conv_ref, stats_ref):
    """p_ref:     (TM, K)    im2col patches for TM output pixels        (VMEM)
       w_ref:     (K, Np)    flattened 3x3 taps, Cout zero-padded to Np (VMEM)
       conv_ref:  (TM, Np)   f32 conv output tile (staged to HBM)       (VMEM)
       stats_ref: (1, 2, Np) per-tile [channel sum ; centered sum-sq]   (VMEM)
    """
    tm = p_ref.shape[0]

    # Single K = 9*Cin contraction on the MXU (replaces 9 separate K=Cin dots
    # and the 9 strided window copies of the previous version).
    # NOTE: for large Cin a K grid axis + pltpu.VMEM scratch accumulator
    # (init/finalize under pl.when) would be added here; unnecessary at K=36.
    acc = jnp.dot(p_ref[...], w_ref[...], preferred_element_type=jnp.float32)
    conv_ref[...] = acc

    # Tile-local two-pass statistics (stable); merged Chan-style in the wrapper
    # into the global batch mean / biased variance.
    tsum = jnp.sum(acc, axis=0, keepdims=True)           # (1, Np)
    tmean = tsum * (1.0 / tm)
    d = acc - tmean
    tssd = jnp.sum(d * d, axis=0, keepdims=True)         # (1, Np)
    stats_ref[0, 0:1, :] = tsum
    stats_ref[0, 1:2, :] = tssd


# ---------------------------------------------------------------------------
# Pass 2: normalize + ReLU (minimal epilogue, lane-dense stores).
# ---------------------------------------------------------------------------
def _bn_relu_kernel(conv_ref, mi_ref, o_ref):
    """conv_ref: (TM, Np) f32 conv tile
       mi_ref:   (2, Np)  row 0 = channel mean, row 1 = 1/sqrt(var + eps)
       o_ref:    (TM, Np) output tile
    """
    y = (conv_ref[...] - mi_ref[0:1, :]) * mi_ref[1:2, :]
    o_ref[...] = jnp.maximum(y, 0.0).astype(o_ref.dtype)


# ---------------------------------------------------------------------------
# Wrapper: NCHW <-> NHWC glue, im2col, stats merge, two pallas_calls.
# ---------------------------------------------------------------------------
def basic_layer_forward(x_nchw, weight_oihw, *, compute_dtype=jnp.float32,
                        tile_rows=256, eps=1e-5):
    """x_nchw: (B, Cin, H, W) f32; weight_oihw: (Cout, Cin, 3, 3) f32.
    Returns (B, Cout, H, W) f32 matching BasicLayer.forward (BN training mode).
    """
    B, Cin, H, W = x_nchw.shape
    Cout = weight_oihw.shape[0]
    K = 9 * Cin
    M = B * H * W

    # ---- glue (plain JAX) -------------------------------------------------
    # TODO(synk): keep activations NHWC end-to-end in the surrounding model and
    # fold the 1-pixel halo into the kernel to remove these extra HBM passes.
    x_nhwc = jnp.transpose(x_nchw, (0, 2, 3, 1))
    x_pad = jnp.pad(x_nhwc, ((0, 0), (1, 1), (1, 1), (0, 0)))

    # im2col once: (B, H, W, 9*Cin) -> (M, K); tap order = (dy*3+dx)*Cin + ci.
    patches = jnp.concatenate(
        [x_pad[:, dy:dy + H, dx:dx + W, :] for dy in range(3) for dx in range(3)],
        axis=-1).reshape(M, K)

    # Flatten taps to (K, Cout) in matching order; pad Cout -> Np (lane-dense).
    Np = _round_up(max(Cout, 128), 128)
    w2 = jnp.transpose(weight_oihw, (2, 3, 1, 0)).reshape(K, Cout)
    w2 = jnp.pad(w2, ((0, 0), (0, Np - Cout)))

    # Pad pixel rows to a multiple of the row tile (padded rows are all-zero;
    # the stats merge below removes their contribution exactly).
    TM = min(_round_up(M, 8), _round_up(tile_rows, 8))
    Mp = _round_up(M, TM)
    patches = jnp.pad(patches, ((0, Mp - M), (0, 0))).astype(compute_dtype)
    w2 = w2.astype(compute_dtype)

    num_tiles = Mp // TM
    cparams = pltpu.CompilerParams(
        dimension_semantics=("parallel",),          # shard across TCs (v7x megacore)
        vmem_limit_bytes=32 * 1024 * 1024)          # fits v7x's 64 MiB / TC

    # ---- pass 1: conv (one MXU matmul per tile) + per-tile BN stats --------
    conv, stats = pl.pallas_call(
        _conv_stats_kernel,
        out_shape=(jax.ShapeDtypeStruct((Mp, Np), jnp.float32),
                   jax.ShapeDtypeStruct((num_tiles, 2, Np), jnp.float32)),
        grid=(num_tiles,),
        in_specs=[pl.BlockSpec((TM, K), lambda i: (i, 0)),
                  pl.BlockSpec((K, Np), lambda i: (0, 0))],
        out_specs=(pl.BlockSpec((TM, Np), lambda i: (i, 0)),
                   pl.BlockSpec((1, 2, Np), lambda i: (i, 0, 0))),
        compiler_params=cparams,
    )(patches, w2)

    # ---- merge per-tile stats -> global batch mean / biased var (tiny, f32) --
    tile_sum = stats[:, 0, :]                                   # (T, Np)
    tile_ssd = stats[:, 1, :]                                   # (T, Np)
    tile_mean = tile_sum / TM
    total_sum = jnp.sum(tile_sum, axis=0)                       # (Np,)
    mean_all = total_sum / Mp
    m2_all = (jnp.sum(tile_ssd, axis=0)
              + TM * jnp.sum((tile_mean - mean_all[None, :]) ** 2, axis=0))
    n_pad = Mp - M
    mean = total_sum / M                                        # padded rows are 0
    ssd = m2_all + Mp * (mean_all - mean) ** 2 - n_pad * mean * mean
    var = ssd / M                                               # biased (training BN)
    inv = jax.lax.rsqrt(var + eps)
    mean_inv = jnp.stack([mean, inv], axis=0)                   # (2, Np)

    # ---- pass 2: normalize + ReLU, lane-dense stores ------------------------
    y = pl.pallas_call(
        _bn_relu_kernel,
        out_shape=jax.ShapeDtypeStruct((Mp, Np), jnp.float32),
        grid=(num_tiles,),
        in_specs=[pl.BlockSpec((TM, Np), lambda i: (i, 0)),
                  pl.BlockSpec((2, Np), lambda i: (0, 0))],
        out_specs=pl.BlockSpec((TM, Np), lambda i: (i, 0)),
        compiler_params=cparams,
    )(conv, mean_inv)

    out_nhwc = y[:M, :Cout].reshape(B, H, W, Cout)
    return jnp.transpose(out_nhwc, (0, 3, 1, 2)).astype(x_nchw.dtype)


def _reference(x_nchw, weight_oihw):
    """Pure-JAX reference mirroring PyTorch semantics (for verification)."""
    conv = jax.lax.conv_general_dilated(
        x_nchw, weight_oihw, window_strides=(1, 1), padding=[(1, 1), (1, 1)],
        dimension_numbers=("NCHW", "OIHW", "NCHW"))
    mean = jnp.mean(conv, axis=(0, 2, 3), keepdims=True)
    var = jnp.mean((conv - mean) ** 2, axis=(0, 2, 3), keepdims=True)  # biased
    y = (conv - mean) / jnp.sqrt(var + 1e-5)
    return jnp.maximum(y, 0.0)


if __name__ == "__main__":
    key = jax.random.PRNGKey(0)
    k_x, k_w = jax.random.split(key)

    B, Cin, Cout, H, W = 2, 4, 8, 16, 16

    x = jax.random.normal(k_x, (B, Cin, H, W), dtype=jnp.float32)
    fan_in = Cin * 3 * 3
    weight = jax.random.normal(k_w, (Cout, Cin, 3, 3), dtype=jnp.float32) * (2.0 / fan_in) ** 0.5

    ref = _reference(x, weight)

    # f32 MXU path: matches the PyTorch f32 module.
    out = jax.block_until_ready(basic_layer_forward(x, weight))
    assert out.shape == (B, Cout, H, W)
    assert jnp.allclose(out, ref, rtol=1e-4, atol=1e-4), float(jnp.max(jnp.abs(out - ref)))

    # bf16-input / f32-accumulate path (recommended on v6e/v7x); looser tolerance.
    out_bf16 = jax.block_until_ready(
        basic_layer_forward(x, weight, compute_dtype=jnp.bfloat16))
    assert jnp.allclose(out_bf16, ref, rtol=1e-1, atol=1e-1), float(jnp.max(jnp.abs(out_bf16 - ref)))

    print("KERNEL_OK")
</pallas_src>

<mosaic_0001>
module attributes {stable_mosaic.version = 11 : i64} {
  func.func @_conv_stats_kernel(%arg0: i32, %arg1: memref<256x36xf32, #tpu.memory_space<vmem>>, %arg2: memref<36x128xf32, #tpu.memory_space<vmem>>, %arg3: memref<256x128xf32, #tpu.memory_space<vmem>>, %arg4: memref<1x2x128xf32, #tpu.memory_space<vmem>>) attributes {dimension_semantics = [#tpu.dimension_semantics<parallel>], iteration_bounds = array<i64: 2>, scalar_prefetch = 0 : i64, scratch_operands = 0 : i64, tpu.core_type = #tpu.core_type<tc>, window_params = [{transform_indices = @transform_0, window_bounds = array<i64: 256, 36>}, {pipeline_mode = #tpu.pipeline_mode<synchronous>, transform_indices = @transform_1, window_bounds = array<i64: 36, 128>}, {transform_indices = @transform_2, window_bounds = array<i64: 256, 128>}, {transform_indices = @transform_3, window_bounds = array<i64: 1, 2, 128>}]} {
    %c0 = arith.constant 0 : index
    %c0_0 = arith.constant 0 : index
    %0 = vector.load %arg1[%c0, %c0_0] : memref<256x36xf32, #tpu.memory_space<vmem>>, vector<256x36xf32>
    %c0_1 = arith.constant 0 : index
    %c0_2 = arith.constant 0 : index
    %1 = vector.load %arg2[%c0_1, %c0_2] : memref<36x128xf32, #tpu.memory_space<vmem>>, vector<36x128xf32>
    %cst = arith.constant dense<0.000000e+00> : vector<256x128xf32>
    %2 = tpu.matmul %0, %1, %cst {dimension_numbers = #tpu.dot_dimension_numbers<[1], [0], [0], [1], [0, 0, 1, 1], [], []>} : vector<256x36xf32>, vector<36x128xf32>, vector<256x128xf32> -> vector<256x128xf32>
    %c0_3 = arith.constant 0 : index
    %c0_4 = arith.constant 0 : index
    %3 = vector.load %arg3[%c0_3, %c0_4] : memref<256x128xf32, #tpu.memory_space<vmem>>, vector<256x128xf32>
    tpu.vector_store %arg3[%c0_3, %c0_4], %2 {strides = array<i32>} : memref<256x128xf32, #tpu.memory_space<vmem>>, vector<256x128xf32>,
    %cst_5 = arith.constant dense<0.000000e+00> : vector<128xf32>
    %4 = vector.multi_reduction <add>, %2, %cst_5 [0] : vector<256x128xf32> to vector<128xf32>
    %5 = vector.shape_cast %4 : vector<128xf32> to vector<1x128xf32>
    %cst_6 = arith.constant 3.906250e-03 : f32
    %6 = vector.broadcast %cst_6 : f32 to vector<1x128xf32>
    %7 = arith.mulf %5, %6 : vector<1x128xf32>
    %8 = vector.broadcast %7 : vector<1x128xf32> to vector<256x128xf32>
    %9 = arith.subf %2, %8 : vector<256x128xf32>
    %10 = arith.mulf %9, %9 : vector<256x128xf32>
    %cst_7 = arith.constant dense<0.000000e+00> : vector<128xf32>
    %11 = vector.multi_reduction <add>, %10, %cst_7 [0] : vector<256x128xf32> to vector<128xf32>
    %12 = vector.shape_cast %11 : vector<128xf32> to vector<1x128xf32>
    %c0_8 = arith.constant 0 : index
    %c0_9 = arith.constant 0 : index
    %c0_10 = arith.constant 0 : index
    %13 = vector.load %arg4[%c0_8, %c0_9, %c0_10] : memref<1x2x128xf32, #tpu.memory_space<vmem>>, vector<1x1x128xf32>
    %14 = vector.shape_cast %13 : vector<1x1x128xf32> to vector<1x128xf32>
    %15 = vector.shape_cast %5 : vector<1x128xf32> to vector<1x1x128xf32>
    tpu.vector_store %arg4[%c0_8, %c0_9, %c0_10], %15 {strides = array<i32>} : memref<1x2x128xf32, #tpu.memory_space<vmem>>, vector<1x1x128xf32>,
    %c0_11 = arith.constant 0 : index
    %c1 = arith.constant 1 : index
    %c0_12 = arith.constant 0 : index
    %16 = vector.load %arg4[%c0_11, %c1, %c0_12] : memref<1x2x128xf32, #tpu.memory_space<vmem>>, vector<1x1x128xf32>
    %17 = vector.shape_cast %16 : vector<1x1x128xf32> to vector<1x128xf32>
    %18 = vector.shape_cast %12 : vector<1x128xf32> to vector<1x1x128xf32>
    tpu.vector_store %arg4[%c0_11, %c1, %c0_12], %18 {strides = array<i32>} : memref<1x2x128xf32, #tpu.memory_space<vmem>>, vector<1x1x128xf32>,
    return
  }
  func.func @transform_0(%arg0: i32) -> (i32, i32) {
    %c0_i32 = arith.constant 0 : i32
    %c0_i32_0 = arith.constant 0 : i32
    return %arg0, %c0_i32 : i32, i32
  }
  func.func @transform_1(%arg0: i32) -> (i32, i32) {
    %c0_i32 = arith.constant 0 : i32
    %c0_i32_0 = arith.constant 0 : i32
    %c0_i32_1 = arith.constant 0 : i32
    return %c0_i32, %c0_i32_0 : i32, i32
  }
  func.func @transform_2(%arg0: i32) -> (i32, i32) {
    %c0_i32 = arith.constant 0 : i32
    %c0_i32_0 = arith.constant 0 : i32
    return %arg0, %c0_i32 : i32, i32
  }
  func.func @transform_3(%arg0: i32) -> (i32, i32, i32) {
    %c0_i32 = arith.constant 0 : i32
    %c0_i32_0 = arith.constant 0 : i32
    %c0_i32_1 = arith.constant 0 : i32
    return %arg0, %c0_i32, %c0_i32_0 : i32, i32, i32
  }
}

</mosaic_0001>

<llo_original>
// kernel: tpu_custom_call.1
$region0: #{tpu_custom_call.1}
  #allocation0 [shape = 'u32[]', space=smem, size = 0x4, offset = 0x4, fixed_abs, tag = 'smem constant byte address 0x4 - core index']
  #allocation1 [shape = 'u32[144,128]{1,0:T(1,128)}', space=vmem, size = 0x12000, scoped, tag = 'internal scratch']
  %s0 = inlined_call_operand.vmem [shape: f32[512,36], index: 0, kind: input, shape index: {}]
  %s1 = inlined_call_operand.vmem [shape: f32[36,128], index: 1, kind: input, shape index: {}]
  %s2 = inlined_call_operand.hbm [shape: f32[512,128], index: 2, kind: output, shape index: {0}]
  %s3 = inlined_call_operand.hbm [shape: f32[2,2,128], index: 3, kind: output, shape index: {1}]
  %4 = xla_tuple %s2, %s3
  %s5 = sld [smem:[#allocation0]]
  $region49: #{tpu_custom_call.1} parent=0
    _
  %s7 = ssub.s32 1, %s5
  %s8 = scalar_select 0, %s7, %s5
  $region1: #{tpu_custom_call.1} parent=0
    #allocation2 [shape = 'u8[262144]{0}', space=vmem, size = 0x40000, scoped, tag = 'output window, operand 0']
    #allocation3 [shape = 's32[2]{0}', space=sflag, size = 0x8, scoped, tag = 'scoped memory for tpu_custom_call.1']
    #allocation4 [shape = 'u8[2048]{0}', space=vmem, size = 0x800, scoped, tag = 'output window, operand 1']
    #allocation5 [shape = 's32[2]{0}', space=sflag, size = 0x8, scoped, tag = 'scoped memory for tpu_custom_call.1']
    %9 = vsyncpa [#allocation3], 0
    %s10 = scalar_lea.sflag [#allocation3], 1
    %11 = vsyncpa %s10, 0
    %12 = vsyncpa [#allocation5], 0
    %s13 = scalar_lea.sflag [#allocation5], 1
    %14 = vsyncpa %s13, 0
    loop: start=0, step=1, limit=4
    $region2: #{tpu_custom_call.1} parent=1 // loop_pre_header
      _
    $region3: #{tpu_custom_call.1} parent=1 // loop_header
      %s16 = sphi 0, %s20
      %p17 = scmp.ge.s32.totalorder %s16, 4
      %s26 = sphi 0, %s28
      %s29 = sphi 0, %s26
      %s30 = sphi 0, %s29
      %s46 = sphi 0, %s30
      %s50 = sphi 0, %s50
      %s52 = sphi 0, %s50
      %s53 = sphi 0, %s52
      %s67 = sphi 0, %s53
      %s73 = sphi 0, %s75
      %s76 = sphi 0, %s73
      %s77 = sphi 0, %s76
      %s93 = sphi 0, %s77
      %s99 = sphi 0, %s101
      %s102 = sphi 0, %s99
      %s103 = sphi 0, %s102
      %s119 = sphi 0, %s103
    $region4: #{tpu_custom_call.1} parent=1 // loop_header_branch
      %19 = sbr.rel (%p17) target = $region8
    $region5: #{tpu_custom_call.1} parent=1 // loop_body
      %s21 = ssub.s32 %s16, 1
      %s22 = ssub.s32 %s16, 2
      %s23 = sadd.s32 %s16, 1
      %s24 = ssub.s32 %s16, %s23
      %p25 = scmp.eq.s32.totalorder %s24, 0
      %s27 = sadd.s32 %s26, 1
      %s28 = scalar_select %p25, %s26, %s27
      %p31 = pneg %p25
      %p32 = scmp.eq.s32.totalorder %s16, 1
      %p33 = por %p31, %p32
      %p34 = scmp.ne.s32.totalorder %s26, %s29
      %p35 = scmp.eq.s32.totalorder %s16, 0
      %p36 = por %p34, %p35
      %p37 = scmp.ne.s32.totalorder %s26, %s29
      %p38 = scmp.eq.s32.totalorder %s21, 1
      %p39 = por %p37, %p38
      %p40 = scmp.ne.s32.totalorder %s29, %s30
      %p41 = scmp.eq.s32.totalorder %s21, 0
      %p42 = por %p40, %p41
      %p43 = scmp.ne.s32.totalorder %s29, %s30
      %p44 = scmp.eq.s32.totalorder %s22, 1
      %p45 = por %p43, %p44
      %p47 = scmp.ne.s32.totalorder %s30, %s46
      %p48 = scmp.eq.s32.totalorder %s22, 0
      %p49 = por %p47, %p48
      %s51 = sadd.s32 %s50, 1
      %p54 = scmp.eq.s32.totalorder %s16, 1
      %p55 = scmp.ne.s32.totalorder %s50, %s52
      %p56 = scmp.eq.s32.totalorder %s16, 0
      %p57 = por %p55, %p56
      %p58 = scmp.ne.s32.totalorder %s50, %s52
      %p59 = scmp.eq.s32.totalorder %s21, 1
      %p60 = por %p58, %p59
      %p61 = scmp.ne.s32.totalorder %s52, %s53
      %p62 = scmp.eq.s32.totalorder %s21, 0
      %p63 = por %p61, %p62
      %p64 = scmp.ne.s32.totalorder %s52, %s53
      %p65 = scmp.eq.s32.totalorder %s22, 1
      %p66 = por %p64, %p65
      %p68 = scmp.ne.s32.totalorder %s53, %s67
      %p69 = scmp.eq.s32.totalorder %s22, 0
      %p70 = por %p68, %p69
      %s71 = ssub.s32 %s16, %s23
      %p72 = scmp.eq.s32.totalorder %s71, 0
      %s74 = sadd.s32 %s73, 1
      %s75 = scalar_select %p72, %s73, %s74
      %p78 = pneg %p72
      %p79 = scmp.eq.s32.totalorder %s16, 1
      %p80 = por %p78, %p79
      %p81 = scmp.ne.s32.totalorder %s73, %s76
      %p82 = scmp.eq.s32.totalorder %s16, 0
      %p83 = por %p81, %p82
      %p84 = scmp.ne.s32.totalorder %s73, %s76
      %p85 = scmp.eq.s32.totalorder %s21, 1
      %p86 = por %p84, %p85
      %p87 = scmp.ne.s32.totalorder %s76, %s77
      %p88 = scmp.eq.s32.totalorder %s21, 0
      %p89 = por %p87, %p88
      %p90 = scmp.ne.s32.totalorder %s76, %s77
      %p91 = scmp.eq.s32.totalorder %s22, 1
      %p92 = por %p90, %p91
      %p94 = scmp.ne.s32.totalorder %s77, %s93
      %p95 = scmp.eq.s32.totalorder %s22, 0
      %p96 = por %p94, %p95
      %s97 = ssub.s32 %s16, %s23
      %p98 = scmp.eq.s32.totalorder %s97, 0
      %s100 = sadd.s32 %s99, 1
      %s101 = scalar_select %p98, %s99, %s100
      %p104 = pneg %p98
      %p105 = scmp.eq.s32.totalorder %s16, 1
      %p106 = por %p104, %p105
      %p107 = scmp.ne.s32.totalorder %s99, %s102
      %p108 = scmp.eq.s32.totalorder %s16, 0
      %p109 = por %p107, %p108
      %p110 = scmp.ne.s32.totalorder %s99, %s102
      %p111 = scmp.eq.s32.totalorder %s21, 1
      %p112 = por %p110, %p111
      %p113 = scmp.ne.s32.totalorder %s102, %s103
      %p114 = scmp.eq.s32.totalorder %s21, 0
      %p115 = por %p113, %p114
      %p116 = scmp.ne.s32.totalorder %s102, %s103
      %p117 = scmp.eq.s32.totalorder %s22, 1
      %p118 = por %p116, %p117
      %p120 = scmp.ne.s32.totalorder %s103, %s119
      %p121 = scmp.eq.s32.totalorder %s22, 0
      %p122 = por %p120, %p121
      %p123 = scmp.le.s32.totalorder 1, %s16
      %p124 = scmp.lt.s32.totalorder %s16, 3
      %p125 = pnand %p123, %p124
      %p126 = pneg %p125
      // Predicated region
      $region9: #{tpu_custom_call.1} parent=5 // pred_check
        _
      $region10: #{tpu_custom_call.1} parent=5 // pred_check_branch
        %128 = sbr.rel (%p125) target = $region12
      $region11: #{tpu_custom_call.1} parent=5 // pred_region
        %s129 = ssub.s32 %s16, 1
        // Predicated region
        $region13: #{tpu_custom_call.1} parent=11 // pred_check
          %p130 = pneg %p63
        $region14: #{tpu_custom_call.1} parent=11 // pred_check_branch
          %132 = sbr.rel (%p130) target = $region16
        $region15: #{tpu_custom_call.1} parent=11 // pred_region
          _
        $region16: #{tpu_custom_call.1} parent=11 // pred_fallthru
          _
      $region12: #{tpu_custom_call.1} parent=5 // pred_fallthru
        _
      %p133 = scmp.lt.s32.totalorder %s16, 2
      // Predicated region
      $region17: #{tpu_custom_call.1} parent=5 // pred_check
        %p134 = pneg %p133
      $region18: #{tpu_custom_call.1} parent=5 // pred_check_branch
        %136 = sbr.rel (%p134) target = $region20
      $region19: #{tpu_custom_call.1} parent=5 // pred_region
        // Predicated region
        $region21: #{tpu_custom_call.1} parent=19 // pred_check
          %p137 = pneg %p36
        $region22: #{tpu_custom_call.1} parent=19 // pred_check_branch
          %139 = sbr.rel (%p137) target = $region24
        $region23: #{tpu_custom_call.1} parent=19 // pred_region
          %s140 = smul.u32 32, %s16
          %p141 = scmp.lt.s32.totalorder %s140, 63
          %s142 = scalar_select %p141, %s140, 63
          %s143 = smul.addr %s142, 8
          %s144 = scalar_lea.vmem %s0, %s143
          %s145 = smul.u32 32, %s16
        $region24: #{tpu_custom_call.1} parent=19 // pred_fallthru
          _
      $region20: #{tpu_custom_call.1} parent=5 // pred_fallthru
        _
      %p146 = scmp.le.s32.totalorder 1, %s16
      %p147 = scmp.lt.s32.totalorder %s16, 3
      %p148 = pnand %p146, %p147
      %p149 = pneg %p148
      // Predicated region
      $region25: #{tpu_custom_call.1} parent=5 // pred_check
        _
      $region26: #{tpu_custom_call.1} parent=5 // pred_check_branch
        %151 = sbr.rel (%p148) target = $region28
      $region27: #{tpu_custom_call.1} parent=5 // pred_region
        %s152 = ssub.s32 %s16, 1
        %s153 = smul.u32 32, %s21
        %p154 = scmp.lt.s32.totalorder %s153, 63
        %s155 = scalar_select %p154, %s153, 63
        %s156 = smul.addr %s155, 8
        %s157 = scalar_lea.vmem %s0, %s156
        %p158 = pneg %p42
        %p159 = pneg %p39
        %p160 = pneg %p63
        %p161 = pneg %p60
        %p162 = pneg %p89
        %p163 = pneg %p86
        %s164 = sand.u32 %s76, 1
        %s165 = scalar_lea.sflag [#allocation3], %s164
        %s166 = sand.u32 %s76, 1
        %s167 = smul.addr %s166, 256
        %s168 = scalar_lea.vmem [#allocation2], %s167
        %p169 = pneg %p115
        %p170 = pneg %p112
        %s171 = sand.u32 %s102, 1
        %s172 = scalar_lea.sflag [#allocation5], %s171
        %s173 = sand.u32 %s102, 1
        %s174 = smul.addr %s173, 2
        %s175 = scalar_lea.vmem [#allocation4], %s174
        %s176 = smul.u32 32, %s21
        %p177 = scmp.lt.s32.totalorder %s176, 63
        %s178 = scalar_select %p177, %s176, 63
        %s179 = smul.addr %s178, 8
        %s180 = scalar_lea.vmem %s0, %s179
        %s181 = smul.u32 32, %s21
        %s182 = smul.u32 32, %s21
        %v183 = vld [vmem:[%s180] sm:$0xff]
        %v184 = vld [vmem:[%s180 + $0x8] sm:$0xff]
        %v185 = vld [vmem:[%s180 + $0x10] sm:$0xff]
        %v186 = vld [vmem:[%s180 + $0x18] sm:$0xff]
        %v187 = vld [vmem:[%s180 + $0x20] sm:$0xff]
        %v188 = vld [vmem:[%s180 + $0x28] sm:$0xff]
        %v189 = vld [vmem:[%s180 + $0x30] sm:$0xff]
        %v190 = vld [vmem:[%s180 + $0x38] sm:$0xff]
        %v191 = vld [vmem:[%s180 + $0x40] sm:$0xff]
        %v192 = vld [vmem:[%s180 + $0x48] sm:$0xff]
        %v193 = vld [vmem:[%s180 + $0x50] sm:$0xff]
        %v194 = vld [vmem:[%s180 + $0x58] sm:$0xff]
        %v195 = vld [vmem:[%s180 + $0x60] sm:$0xff]
        %v196 = vld [vmem:[%s180 + $0x68] sm:$0xff]
        %v197 = vld [vmem:[%s180 + $0x70] sm:$0xff]
        %v198 = vld [vmem:[%s180 + $0x78] sm:$0xff]
        %v199 = vld [vmem:[%s180 + $0x80] sm:$0xff]
        %v200 = vld [vmem:[%s180 + $0x88] sm:$0xff]
        %v201 = vld [vmem:[%s180 + $0x90] sm:$0xff]
        %v202 = vld [vmem:[%s180 + $0x98] sm:$0xff]
        %v203 = vld [vmem:[%s180 + $0xa0] sm:$0xff]
        %v204 = vld [vmem:[%s180 + $0xa8] sm:$0xff]
        %v205 = vld [vmem:[%s180 + $0xb0] sm:$0xff]
        %v206 = vld [vmem:[%s180 + $0xb8] sm:$0xff]
        %v207 = vld [vmem:[%s180 + $0xc0] sm:$0xff]
        %v208 = vld [vmem:[%s180 + $0xc8] sm:$0xff]
        %v209 = vld [vmem:[%s180 + $0xd0] sm:$0xff]
        %v210 = vld [vmem:[%s180 + $0xd8] sm:$0xff]
        %v211 = vld [vmem:[%s180 + $0xe0] sm:$0xff]
        %v212 = vld [vmem:[%s180 + $0xe8] sm:$0xff]
        %v213 = vld [vmem:[%s180 + $0xf0] sm:$0xff]
        %v214 = vld [vmem:[%s180 + $0xf8] sm:$0xff]
        %v215 = vld [vmem:[%s1] sm:$0xff]
        %v216 = vld [vmem:[%s1 + $0x8] sm:$0xff]
        %v217 = vld [vmem:[%s1 + $0x10] sm:$0xff]
        %v218 = vld [vmem:[%s1 + $0x18] sm:$0xff]
        %v219 = vld [vmem:[%s1 + $0x20] sm:$0xf]
        %vm220 = vcmask 293888
        %v222 = vsel %vm220, %v183, 0
        %v225 = vsel %vm220, %v184, 0
        %v228 = vsel %vm220, %v185, 0
        %v231 = vsel %vm220, %v186, 0
        %v234 = vsel %vm220, %v187, 0
        %v237 = vsel %vm220, %v188, 0
        %v240 = vsel %vm220, %v189, 0
        %v243 = vsel %vm220, %v190, 0
        %v246 = vsel %vm220, %v191, 0
        %v249 = vsel %vm220, %v192, 0
        %v252 = vsel %vm220, %v193, 0
        %v255 = vsel %vm220, %v194, 0
        %v258 = vsel %vm220, %v195, 0
        %v261 = vsel %vm220, %v196, 0
        %v264 = vsel %vm220, %v197, 0
        %v267 = vsel %vm220, %v198, 0
        %v270 = vsel %vm220, %v199, 0
        %v273 = vsel %vm220, %v200, 0
        %v276 = vsel %vm220, %v201, 0
        %v279 = vsel %vm220, %v202, 0
        %v282 = vsel %vm220, %v203, 0
        %v285 = vsel %vm220, %v204, 0
        %v288 = vsel %vm220, %v205, 0
        %v291 = vsel %vm220, %v206, 0
        %v294 = vsel %vm220, %v207, 0
        %v297 = vsel %vm220, %v208, 0
        %v300 = vsel %vm220, %v209, 0
        %v303 = vsel %vm220, %v210, 0
        %v306 = vsel %vm220, %v211, 0
        %v309 = vsel %vm220, %v212, 0
        %v312 = vsel %vm220, %v213, 0
        %v315 = vsel %vm220, %v214, 0
        %vm317 = vcmask 1043456
        %v319 = vsel %vm317, %v219, 0
        %321 = vmatprep.subr.mxu0 0.0
        %322 = vmatpush1.msra.mxu0 0.0
        %323 = vmatprep.subr.mxu0 0.0
        %324 = vmatpush1.msra.mxu0 0.0
        %325 = vmatprep.subr.mxu0 0.0
        %326 = vmatpush1.msra.mxu0 0.0
        %327 = vmatprep.subr.mxu0 0.0
        %328 = vmatpush1.msra.mxu0 0.0
        %329 = vmatprep.subr.mxu0 0.0
        %330 = vmatpush1.msra.mxu0 0.0
        %331 = vmatprep.subr.mxu0 0.0
        %332 = vmatpush1.msra.mxu0 0.0
        %333 = vmatprep.subr.mxu0 0.0
        %334 = vmatpush1.msra.mxu0 0.0
        %335 = vmatprep.subr.mxu0 0.0
        %336 = vmatpush1.msra.mxu0 0.0
        %337 = vmatprep.subr.mxu0 0.0
        %338 = vmatpush1.msra.mxu0 0.0
        %339 = vmatprep.subr.mxu0 0.0
        %340 = vmatpush1.msra.mxu0 0.0
        %341 = vmatprep.subr.mxu0 0.0
        %342 = vmatpush1.msra.mxu0 0.0
        %343 = vmatprep.subr.mxu0 0.0
        %344 = vmatpush1.msra.mxu0 %v319
        %345 = vmatprep.subr.mxu0 0.0
        %346 = vmatpush1.msra.mxu0 %v218
        %347 = vmatprep.subr.mxu0 0.0
        %348 = vmatpush1.msra.mxu0 %v217
        %349 = vmatprep.subr.mxu0 0.0
        %350 = vmatpush1.msra.mxu0 %v216
        %351 = vmatprep.subr.mxu0 0.0
        %352 = vmatpush1.msra.mxu0 %v215
        %353 = vmatprep.subr.mxu0 0.0
        %354 = vmatpush2.msra.mxu0 0.0
        %355 = vmatprep.subr.mxu0 0.0
        %356 = vmatpush2.msra.mxu0 0.0
        %357 = vmatprep.subr.mxu0 0.0
        %358 = vmatpush2.msra.mxu0 0.0
        %359 = vmatprep.subr.mxu0 0.0
        %360 = vmatpush2.msra.mxu0 0.0
        %361 = vmatprep.subr.mxu0 0.0
        %362 = vmatpush2.msra.mxu0 0.0
        %363 = vmatprep.subr.mxu0 0.0
        %364 = vmatpush2.msra.mxu0 0.0
        %365 = vmatprep.subr.mxu0 0.0
        %366 = vmatpush2.msra.mxu0 0.0
        %367 = vmatprep.subr.mxu0 0.0
        %368 = vmatpush2.msra.mxu0 0.0
        %369 = vmatprep.subr.mxu0 0.0
        %370 = vmatpush2.msra.mxu0 0.0
        %371 = vmatprep.subr.mxu0 0.0
        %372 = vmatpush2.msra.mxu0 0.0
        %373 = vmatprep.subr.mxu0 0.0
        %374 = vmatpush2.msra.mxu0 0.0
        %375 = vmatprep.subr.mxu0 0.0
        %376 = vmatpush2.msra.mxu0 0.0
        %377 = vmatprep.subr.mxu0 0.0
        %378 = vmatpush2.msra.mxu0 0.0
        %379 = vmatprep.subr.mxu0 0.0
        %380 = vmatpush2.msra.mxu0 0.0
        %381 = vmatprep.subr.mxu0 0.0
        %382 = vmatpush2.msra.mxu0 0.0
        %383 = vmatprep.subr.mxu0 0.0
        %384 = vmatpush2.msra.mxu0 0.0
        %385 = vmatprep.mubr.f32.mxu0 0.0
        %386 = vmatmul.mubr.f32.gmra.mxu0 %v222
        %v387 = vpop.f32.mrf.mxu0
        %v388 = vadd.f32 0.0, %v387
        %v389 = vpop.f32.mrf.mxu0
        %390 = vmatprep.mubr.f32.mxu0 0.0
        %391 = vmatmul.mubr.f32.gmra.mxu0 %v225
        %v392 = vpop.f32.mrf.mxu0
        %v393 = vadd.f32 0.0, %v392
        %v394 = vpop.f32.mrf.mxu0
        %395 = vmatprep.mubr.f32.mxu0 0.0
        %396 = vmatmul.mubr.f32.gmra.mxu0 %v228
        %v397 = vpop.f32.mrf.mxu0
        %v398 = vadd.f32 0.0, %v397
        %v399 = vpop.f32.mrf.mxu0
        %400 = vmatprep.mubr.f32.mxu0 0.0
        %401 = vmatmul.mubr.f32.gmra.mxu0 %v231
        %v402 = vpop.f32.mrf.mxu0
        %v403 = vadd.f32 0.0, %v402
        %v404 = vpop.f32.mrf.mxu0
        %405 = vmatprep.mubr.f32.mxu0 0.0
        %406 = vmatmul.mubr.f32.gmra.mxu0 %v234
        %v407 = vpop.f32.mrf.mxu0
        %v408 = vadd.f32 0.0, %v407
        %v409 = vpop.f32.mrf.mxu0
        %410 = vmatprep.mubr.f32.mxu0 0.0
        %411 = vmatmul.mubr.f32.gmra.mxu0 %v237
        %v412 = vpop.f32.mrf.mxu0
        %v413 = vadd.f32 0.0, %v412
        %v414 = vpop.f32.mrf.mxu0
        %415 = vmatprep.mubr.f32.mxu0 0.0
        %416 = vmatmul.mubr.f32.gmra.mxu0 %v240
        %v417 = vpop.f32.mrf.mxu0
        %v418 = vadd.f32 0.0, %v417
        %v419 = vpop.f32.mrf.mxu0
        %420 = vmatprep.mubr.f32.mxu0 0.0
        %421 = vmatmul.mubr.f32.gmra.mxu0 %v243
        %v422 = vpop.f32.mrf.mxu0
        %v423 = vadd.f32 0.0, %v422
        %v424 = vpop.f32.mrf.mxu0
        %425 = vmatprep.mubr.f32.mxu0 0.0
        %426 = vmatmul.mubr.f32.gmra.mxu0 %v246
        %v427 = vpop.f32.mrf.mxu0
        %v428 = vadd.f32 0.0, %v427
        %v429 = vpop.f32.mrf.mxu0
        %430 = vmatprep.mubr.f32.mxu0 0.0
        %431 = vmatmul.mubr.f32.gmra.mxu0 %v249
        %v432 = vpop.f32.mrf.mxu0
        %v433 = vadd.f32 0.0, %v432
        %v434 = vpop.f32.mrf.mxu0
        %435 = vmatprep.mubr.f32.mxu0 0.0
        %436 = vmatmul.mubr.f32.gmra.mxu0 %v252
        %v437 = vpop.f32.mrf.mxu0
        %v438 = vadd.f32 0.0, %v437
        %v439 = vpop.f32.mrf.mxu0
        %440 = vmatprep.mubr.f32.mxu0 0.0
        %441 = vmatmul.mubr.f32.gmra.mxu0 %v255
        %v442 = vpop.f32.mrf.mxu0
        %v443 = vadd.f32 0.0, %v442
        %v444 = vpop.f32.mrf.mxu0
        %445 = vmatprep.mubr.f32.mxu0 0.0
        %446 = vmatmul.mubr.f32.gmra.mxu0 %v258
        %v447 = vpop.f32.mrf.mxu0
        %v448 = vadd.f32 0.0, %v447
        %v449 = vpop.f32.mrf.mxu0
        %450 = vmatprep.mubr.f32.mxu0 0.0
        %451 = vmatmul.mubr.f32.gmra.mxu0 %v261
        %v452 = vpop.f32.mrf.mxu0
        %v453 = vadd.f32 0.0, %v452
        %v454 = vpop.f32.mrf.mxu0
        %455 = vmatprep.mubr.f32.mxu0 0.0
        %456 = vmatmul.mubr.f32.gmra.mxu0 %v264
        %v457 = vpop.f32.mrf.mxu0
        %v458 = vadd.f32 0.0, %v457
        %v459 = vpop.f32.mrf.mxu0
        %460 = vmatprep.mubr.f32.mxu0 0.0
        %461 = vmatmul.mubr.f32.gmra.mxu0 %v267
        %v462 = vpop.f32.mrf.mxu0
        %v463 = vadd.f32 0.0, %v462
        %v464 = vpop.f32.mrf.mxu0
        %465 = vmatprep.mubr.f32.mxu0 0.0
        %466 = vmatmul.mubr.f32.gmra.mxu0 %v270
        %v467 = vpop.f32.mrf.mxu0
        %v468 = vadd.f32 0.0, %v467
        %v469 = vpop.f32.mrf.mxu0
        %470 = vmatprep.mubr.f32.mxu0 0.0
        %471 = vmatmul.mubr.f32.gmra.mxu0 %v273
        %v472 = vpop.f32.mrf.mxu0
        %v473 = vadd.f32 0.0, %v472
        %v474 = vpop.f32.mrf.mxu0
        %475 = vmatprep.mubr.f32.mxu0 0.0
        %476 = vmatmul.mubr.f32.gmra.mxu0 %v276
        %v477 = vpop.f32.mrf.mxu0
        %v478 = vadd.f32 0.0, %v477
        %v479 = vpop.f32.mrf.mxu0
        %480 = vmatprep.mubr.f32.mxu0 0.0
        %481 = vmatmul.mubr.f32.gmra.mxu0 %v279
        %v482 = vpop.f32.mrf.mxu0
        %v483 = vadd.f32 0.0, %v482
        %v484 = vpop.f32.mrf.mxu0
        %485 = vmatprep.mubr.f32.mxu0 0.0
        %486 = vmatmul.mubr.f32.gmra.mxu0 %v282
        %v487 = vpop.f32.mrf.mxu0
        %v488 = vadd.f32 0.0, %v487
        %v489 = vpop.f32.mrf.mxu0
        %490 = vmatprep.mubr.f32.mxu0 0.0
        %491 = vmatmul.mubr.f32.gmra.mxu0 %v285
        %v492 = vpop.f32.mrf.mxu0
        %v493 = vadd.f32 0.0, %v492
        %v494 = vpop.f32.mrf.mxu0
        %495 = vmatprep.mubr.f32.mxu0 0.0
        %496 = vmatmul.mubr.f32.gmra.mxu0 %v288
        %v497 = vpop.f32.mrf.mxu0
        %v498 = vadd.f32 0.0, %v497
        %v499 = vpop.f32.mrf.mxu0
        %500 = vmatprep.mubr.f32.mxu0 0.0
        %501 = vmatmul.mubr.f32.gmra.mxu0 %v291
        %v502 = vpop.f32.mrf.mxu0
        %v503 = vadd.f32 0.0, %v502
        %v504 = vpop.f32.mrf.mxu0
        %505 = vmatprep.mubr.f32.mxu0 0.0
        %506 = vmatmul.mubr.f32.gmra.mxu0 %v294
        %v507 = vpop.f32.mrf.mxu0
        %v508 = vadd.f32 0.0, %v507
        %v509 = vpop.f32.mrf.mxu0
        %510 = vmatprep.mubr.f32.mxu0 0.0
        %511 = vmatmul.mubr.f32.gmra.mxu0 %v297
        %v512 = vpop.f32.mrf.mxu0
        %v513 = vadd.f32 0.0, %v512
        %v514 = vpop.f32.mrf.mxu0
        %515 = vmatprep.mubr.f32.mxu0 0.0
        %516 = vmatmul.mubr.f32.gmra.mxu0 %v300
        %v517 = vpop.f32.mrf.mxu0
        %v518 = vadd.f32 0.0, %v517
        %v519 = vpop.f32.mrf.mxu0
        %520 = vmatprep.mubr.f32.mxu0 0.0
        %521 = vmatmul.mubr.f32.gmra.mxu0 %v303
        %v522 = vpop.f32.mrf.mxu0
        %v523 = vadd.f32 0.0, %v522
        %v524 = vpop.f32.mrf.mxu0
        %525 = vmatprep.mubr.f32.mxu0 0.0
        %526 = vmatmul.mubr.f32.gmra.mxu0 %v306
        %v527 = vpop.f32.mrf.mxu0
        %v528 = vadd.f32 0.0, %v527
        %v529 = vpop.f32.mrf.mxu0
        %530 = vmatprep.mubr.f32.mxu0 0.0
        %531 = vmatmul.mubr.f32.gmra.mxu0 %v309
        %v532 = vpop.f32.mrf.mxu0
        %v533 = vadd.f32 0.0, %v532
        %v534 = vpop.f32.mrf.mxu0
        %535 = vmatprep.mubr.f32.mxu0 0.0
        %536 = vmatmul.mubr.f32.gmra.mxu0 %v312
        %v537 = vpop.f32.mrf.mxu0
        %v538 = vadd.f32 0.0, %v537
        %v539 = vpop.f32.mrf.mxu0
        %540 = vmatprep.mubr.f32.mxu0 0.0
        %541 = vmatmul.mubr.f32.gmra.mxu0 %v315
        %v542 = vpop.f32.mrf.mxu0
        %v543 = vadd.f32 0.0, %v542
        %v544 = vpop.f32.mrf.mxu0
        %545 = vdwg.mxu0
        %546 = vst [vmem:[%s168] sm:$0xff] %v388
        %547 = vst [vmem:[%s168 + $0x8] sm:$0xff] %v393
        %548 = vst [vmem:[%s168 + $0x10] sm:$0xff] %v398
        %549 = vst [vmem:[%s168 + $0x18] sm:$0xff] %v403
        %550 = vst [vmem:[%s168 + $0x20] sm:$0xff] %v408
        %551 = vst [vmem:[%s168 + $0x28] sm:$0xff] %v413
        %552 = vst [vmem:[%s168 + $0x30] sm:$0xff] %v418
        %553 = vst [vmem:[%s168 + $0x38] sm:$0xff] %v423
        %554 = vst [vmem:[%s168 + $0x40] sm:$0xff] %v428
        %555 = vst [vmem:[%s168 + $0x48] sm:$0xff] %v433
        %556 = vst [vmem:[%s168 + $0x50] sm:$0xff] %v438
        %557 = vst [vmem:[%s168 + $0x58] sm:$0xff] %v443
        %558 = vst [vmem:[%s168 + $0x60] sm:$0xff] %v448
        %559 = vst [vmem:[%s168 + $0x68] sm:$0xff] %v453
        %560 = vst [vmem:[%s168 + $0x70] sm:$0xff] %v458
        %561 = vst [vmem:[%s168 + $0x78] sm:$0xff] %v463
        %562 = vst [vmem:[%s168 + $0x80] sm:$0xff] %v468
        %563 = vst [vmem:[%s168 + $0x88] sm:$0xff] %v473
        %564 = vst [vmem:[%s168 + $0x90] sm:$0xff] %v478
        %565 = vst [vmem:[%s168 + $0x98] sm:$0xff] %v483
        %566 = vst [vmem:[%s168 + $0xa0] sm:$0xff] %v488
        %567 = vst [vmem:[%s168 + $0xa8] sm:$0xff] %v493
        %568 = vst [vmem:[%s168 + $0xb0] sm:$0xff] %v498
        %569 = vst [vmem:[%s168 + $0xb8] sm:$0xff] %v503
        %570 = vst [vmem:[%s168 + $0xc0] sm:$0xff] %v508
        %571 = vst [vmem:[%s168 + $0xc8] sm:$0xff] %v513
        %572 = vst [vmem:[%s168 + $0xd0] sm:$0xff] %v518
        %573 = vst [vmem:[%s168 + $0xd8] sm:$0xff] %v523
        %574 = vst [vmem:[%s168 + $0xe0] sm:$0xff] %v528
        %575 = vst [vmem:[%s168 + $0xe8] sm:$0xff] %v533
        %576 = vst [vmem:[%s168 + $0xf0] sm:$0xff] %v538
        %577 = vst [vmem:[%s168 + $0xf8] sm:$0xff] %v543
        %v578 = vadd.f32 %v388, %v393
        %v579 = vadd.f32 %v578, %v398
        %v580 = vadd.f32 %v579, %v403
        %v581 = vadd.f32 %v580, %v408
        %v582 = vadd.f32 %v581, %v413
        %v583 = vadd.f32 %v582, %v418
        %v584 = vadd.f32 %v583, %v423
        %v585 = vadd.f32 %v584, %v428
        %v586 = vadd.f32 %v585, %v433
        %v587 = vadd.f32 %v586, %v438
        %v588 = vadd.f32 %v587, %v443
        %v589 = vadd.f32 %v588, %v448
        %v590 = vadd.f32 %v589, %v453
        %v591 = vadd.f32 %v590, %v458
        %v592 = vadd.f32 %v591, %v463
        %v593 = vadd.f32 %v592, %v468
        %v594 = vadd.f32 %v593, %v473
        %v595 = vadd.f32 %v594, %v478
        %v596 = vadd.f32 %v595, %v483
        %v597 = vadd.f32 %v596, %v488
        %v598 = vadd.f32 %v597, %v493
        %v599 = vadd.f32 %v598, %v498
        %v600 = vadd.f32 %v599, %v503
        %v601 = vadd.f32 %v600, %v508
        %v602 = vadd.f32 %v601, %v513
        %v603 = vadd.f32 %v602, %v518
        %v604 = vadd.f32 %v603, %v523
        %v605 = vadd.f32 %v604, %v528
        %v606 = vadd.f32 %v605, %v533
        %v607 = vadd.f32 %v606, %v538
        %v608 = vadd.f32 %v607, %v543
        %v609 = vrot.slane %v608, 4
        %v610 = vadd.f32 %v608, %v609
        %v611 = vrot.slane %v610, 2
        %v612 = vadd.f32 %v610, %v611
        %v613 = vrot.slane %v612, 1
        %v614 = vadd.f32 %v612, %v613
        %v615 = vmul.f32 %v614, 0.00390625
        %v616 = vsub.f32 %v388, %v615
        %v617 = vsub.f32 %v393, %v615
        %v618 = vsub.f32 %v398, %v615
        %v619 = vsub.f32 %v403, %v615
        %v620 = vsub.f32 %v408, %v615
        %v621 = vsub.f32 %v413, %v615
        %v622 = vsub.f32 %v418, %v615
        %v623 = vsub.f32 %v423, %v615
        %v624 = vsub.f32 %v428, %v615
        %v625 = vsub.f32 %v433, %v615
        %v626 = vsub.f32 %v438, %v615
        %v627 = vsub.f32 %v443, %v615
        %v628 = vsub.f32 %v448, %v615
        %v629 = vsub.f32 %v453, %v615
        %v630 = vsub.f32 %v458, %v615
        %v631 = vsub.f32 %v463, %v615
        %v632 = vsub.f32 %v468, %v615
        %v633 = vsub.f32 %v473, %v615
        %v634 = vsub.f32 %v478, %v615
        %v635 = vsub.f32 %v483, %v615
        %v636 = vsub.f32 %v488, %v615
        %v637 = vsub.f32 %v493, %v615
        %v638 = vsub.f32 %v498, %v615
        %v639 = vsub.f32 %v503, %v615
        %v640 = vsub.f32 %v508, %v615
        %v641 = vsub.f32 %v513, %v615
        %v642 = vsub.f32 %v518, %v615
        %v643 = vsub.f32 %v523, %v615
        %v644 = vsub.f32 %v528, %v615
        %v645 = vsub.f32 %v533, %v615
        %v646 = vsub.f32 %v538, %v615
        %v647 = vsub.f32 %v543, %v615
        %v648 = vmul.f32 %v616, %v616
        %v649 = vmul.f32 %v617, %v617
        %v650 = vmul.f32 %v618, %v618
        %v651 = vmul.f32 %v619, %v619
        %v652 = vmul.f32 %v620, %v620
        %v653 = vmul.f32 %v621, %v621
        %v654 = vmul.f32 %v622, %v622
        %v655 = vmul.f32 %v623, %v623
        %v656 = vmul.f32 %v624, %v624
        %v657 = vmul.f32 %v625, %v625
        %v658 = vmul.f32 %v626, %v626
        %v659 = vmul.f32 %v627, %v627
        %v660 = vmul.f32 %v628, %v628
        %v661 = vmul.f32 %v629, %v629
        %v662 = vmul.f32 %v630, %v630
        %v663 = vmul.f32 %v631, %v631
        %v664 = vmul.f32 %v632, %v632
        %v665 = vmul.f32 %v633, %v633
        %v666 = vmul.f32 %v634, %v634
        %v667 = vmul.f32 %v635, %v635
        %v668 = vmul.f32 %v636, %v636
        %v669 = vmul.f32 %v637, %v637
        %v670 = vmul.f32 %v638, %v638
        %v671 = vmul.f32 %v639, %v639
        %v672 = vmul.f32 %v640, %v640
        %v673 = vmul.f32 %v641, %v641
        %v674 = vmul.f32 %v642, %v642
        %v675 = vmul.f32 %v643, %v643
        %v676 = vmul.f32 %v644, %v644
        %v677 = vmul.f32 %v645, %v645
        %v678 = vmul.f32 %v646, %v646
        %v679 = vmul.f32 %v647, %v647
        %v680 = vadd.f32 %v648, %v649
        %v681 = vadd.f32 %v680, %v650
        %v682 = vadd.f32 %v681, %v651
        %v683 = vadd.f32 %v682, %v652
        %v684 = vadd.f32 %v683, %v653
        %v685 = vadd.f32 %v684, %v654
        %v686 = vadd.f32 %v685, %v655
        %v687 = vadd.f32 %v686, %v656
        %v688 = vadd.f32 %v687, %v657
        %v689 = vadd.f32 %v688, %v658
        %v690 = vadd.f32 %v689, %v659
        %v691 = vadd.f32 %v690, %v660
        %v692 = vadd.f32 %v691, %v661
        %v693 = vadd.f32 %v692, %v662
        %v694 = vadd.f32 %v693, %v663
        %v695 = vadd.f32 %v694, %v664
        %v696 = vadd.f32 %v695, %v665
        %v697 = vadd.f32 %v696, %v666
        %v698 = vadd.f32 %v697, %v667
        %v699 = vadd.f32 %v698, %v668
        %v700 = vadd.f32 %v699, %v669
        %v701 = vadd.f32 %v700, %v670
        %v702 = vadd.f32 %v701, %v671
        %v703 = vadd.f32 %v702, %v672
        %v704 = vadd.f32 %v703, %v673
        %v705 = vadd.f32 %v704, %v674
        %v706 = vadd.f32 %v705, %v675
        %v707 = vadd.f32 %v706, %v676
        %v708 = vadd.f32 %v707, %v677
        %v709 = vadd.f32 %v708, %v678
        %v710 = vadd.f32 %v709, %v679
        %v711 = vrot.slane %v710, 4
        %v712 = vadd.f32 %v710, %v711
        %v713 = vrot.slane %v712, 2
        %v714 = vadd.f32 %v712, %v713
        %v715 = vrot.slane %v714, 1
        %v716 = vadd.f32 %v714, %v715
        %717 = vst [vmem:[%s175] sm:$0x1] %v614
        %718 = vst [vmem:[%s175 + $0x1] sm:$0x1] %v716
        %s719 = sand.u32 %s76, 1
        %s720 = scalar_lea.sflag [#allocation3], %s719
        %s721 = sand.u32 %s76, 1
        %s722 = smul.addr %s721, 256
        %s723 = scalar_lea.vmem [#allocation2], %s722
        %s724 = sand.u32 %s102, 1
        %s725 = scalar_lea.sflag [#allocation5], %s724
        %s726 = sand.u32 %s102, 1
        %s727 = smul.addr %s726, 2
        %s728 = scalar_lea.vmem [#allocation4], %s727
        // Predicated region
        $region29: #{tpu_custom_call.1} parent=27 // pred_check
          %p729 = pneg %p86
        $region30: #{tpu_custom_call.1} parent=27 // pred_check_branch
          %731 = sbr.rel (%p729) target = $region32
        $region31: #{tpu_custom_call.1} parent=27 // pred_region
          %s732 = smul.u32 32, %s21
          %s734 = ssub.s32 4096, 4096
          %735 = vsyncadd %s720, %s734
          %s736 = smul.addr %s732, 128
          %s737 = scalar_lea.hbm %s2, %s736
          %s738 = sshll.u32 %s723, 4
          %s739 = int_to_ptr.vmem [resolvable:$true] %s738
          %744 = dma.vmem_to_hbm [thread:$0]  %s739, 4096, %s737, %s720, 128, 128, 8
        $region32: #{tpu_custom_call.1} parent=27 // pred_fallthru
          _
        // Predicated region
        $region33: #{tpu_custom_call.1} parent=27 // pred_check
          %p745 = pneg %p112
        $region34: #{tpu_custom_call.1} parent=27 // pred_check_branch
          %747 = sbr.rel (%p745) target = $region36
        $region35: #{tpu_custom_call.1} parent=27 // pred_region
          %s749 = ssub.s32 32, 32
          %750 = vsyncadd %s725, %s749
          %s751 = smul.addr %s21, 32
          %s752 = scalar_lea.hbm %s3, %s751
          %s754 = sshll.u32 %s728, 4
          %s755 = int_to_ptr.vmem [resolvable:$true] %s754
          %757 = dma.vmem_to_hbm [thread:$0]  %s755, 32, %s752, %s725
        $region36: #{tpu_custom_call.1} parent=27 // pred_fallthru
          _
      $region28: #{tpu_custom_call.1} parent=5 // pred_fallthru
        _
      %p758 = scmp.le.s32.totalorder 2, %s16
      // Predicated region
      $region37: #{tpu_custom_call.1} parent=5 // pred_check
        %p759 = pneg %p758
      $region38: #{tpu_custom_call.1} parent=5 // pred_check_branch
        %761 = sbr.rel (%p759) target = $region40
      $region39: #{tpu_custom_call.1} parent=5 // pred_region
        %s762 = ssub.s32 %s16, 2
        // Predicated region
        $region41: #{tpu_custom_call.1} parent=39 // pred_check
          %p763 = pneg %p92
        $region42: #{tpu_custom_call.1} parent=39 // pred_check_branch
          %765 = sbr.rel (%p763) target = $region44
        $region43: #{tpu_custom_call.1} parent=39 // pred_region
          %s766 = sand.u32 %s77, 1
          %s767 = scalar_lea.sflag [#allocation3], %s766
          %s768 = sand.u32 %s77, 1
          %s769 = smul.addr %s768, 256
          %s770 = scalar_lea.vmem [#allocation2], %s769
          %771 = dma.done %s767, 4096
        $region44: #{tpu_custom_call.1} parent=39 // pred_fallthru
          _
        // Predicated region
        $region45: #{tpu_custom_call.1} parent=39 // pred_check
          %p772 = pneg %p118
        $region46: #{tpu_custom_call.1} parent=39 // pred_check_branch
          %774 = sbr.rel (%p772) target = $region48
        $region47: #{tpu_custom_call.1} parent=39 // pred_region
          %s775 = sand.u32 %s103, 1
          %s776 = scalar_lea.sflag [#allocation5], %s775
          %s777 = sand.u32 %s103, 1
          %s778 = smul.addr %s777, 2
          %s779 = scalar_lea.vmem [#allocation4], %s778
          %780 = dma.done %s776, 32
        $region48: #{tpu_custom_call.1} parent=39 // pred_fallthru
          _
      $region40: #{tpu_custom_call.1} parent=5 // pred_fallthru
        _
    $region6: #{tpu_custom_call.1} parent=1 // loop_footer
      %s20 = sadd.s32 1, %s16
    $region7: #{tpu_custom_call.1} parent=1 // loop_footer_branch
      %15 = sbr.rel target = $region3
    $region8: #{tpu_custom_call.1} parent=1 // loop_exit
      _
    %781 = vsyncpa [#allocation3], 1
    %s782 = scalar_lea.sflag [#allocation3], 1
    %783 = vsyncpa %s782, 1
    %784 = vsyncpa [#allocation5], 1
    %s785 = scalar_lea.sflag [#allocation5], 1
    %786 = vsyncpa %s785, 1

</llo_original>
